<compile_context>
chip_gen: v7x
topology: tpu7x:2x2x1
jax: 0.10.0
libtpu: 0.0.40
codegen_flags: <defaults>
</compile_context>

<pallas_src>
import functools

import jax
import jax.numpy as jnp
from jax.experimental import pallas as pl
from jax.experimental.pallas import tpu as pltpu

_LANES = 128
_SUBLANES = 8


def _bce_kernel(pred_ref, tgt_ref, out_ref, *, inv_n, hard_labels):
    p = pred_ref[...]
    t = tgt_ref[...]
    if hard_labels:
        # Exact only for t in {0, 1}: halves the EUP log count.
        p_sel = jnp.where(t > 0.5, p, 1.0 - p)
        loss = -jnp.maximum(jnp.log(p_sel), -100.0)
    else:
        # PyTorch BCELoss clamps each log term at -100 to avoid -inf.
        log_p = jnp.maximum(jnp.log(p), -100.0)
        log_1mp = jnp.maximum(jnp.log(1.0 - p), -100.0)
        loss = -(t * log_p + (1.0 - t) * log_1mp)
    # Mean over the *unpadded* element count (padding contributes exactly 0).
    out_ref[0, 0] = jnp.sum(loss) * inv_n


def bce_loss(pred, target, hard_labels=False):
    """pred: any-shape float32 probabilities in (0,1); target: (pred.size,) float32.

    Matches torch.nn.BCELoss()(pred.view(-1), target) with reduction='mean'.
    Set hard_labels=True only if target is guaranteed to be in {0, 1}.
    """
    n = pred.size
    assert target.shape == (n,), "target must match pred.view(-1)"

    p_flat = pred.reshape(-1).astype(jnp.float32)   # same order as pred.view(-1)
    t_flat = target.reshape(-1).astype(jnp.float32)

    # Pad to a multiple of 8*128 so the kernel sees full (8,128) vregs.
    # Pad values (p=1, t=1) contribute exactly 0 loss in both kernel paths:
    #   t*log(p) = 1*log(1) = 0,  (1-t)*clamp(log(0)) = 0*(-100) = 0.
    tile = _SUBLANES * _LANES
    n_pad = ((n + tile - 1) // tile) * tile
    if n_pad != n:
        p_flat = jnp.pad(p_flat, (0, n_pad - n), constant_values=1.0)
        t_flat = jnp.pad(t_flat, (0, n_pad - n), constant_values=1.0)
    rows = n_pad // _LANES
    p2 = p_flat.reshape(rows, _LANES)
    t2 = t_flat.reshape(rows, _LANES)

    kernel = functools.partial(
        _bce_kernel, inv_n=1.0 / float(n), hard_labels=hard_labels
    )

    # Whole problem is one VMEM tile -> no grid, no pipelining overhead.
    # TODO(synk): for very large N (> ~VMEM limit) add a row-block grid with an
    # SMEM accumulator; NCF batches never get there.
    out = pl.pallas_call(
        kernel,
        out_shape=jax.ShapeDtypeStruct((1, 1), jnp.float32),
        in_specs=[
            pl.BlockSpec(memory_space=pltpu.MemorySpace.VMEM),
            pl.BlockSpec(memory_space=pltpu.MemorySpace.VMEM),
        ],
        out_specs=pl.BlockSpec(memory_space=pltpu.MemorySpace.SMEM),
    )(p2, t2)
    return out[0, 0]


def bce_loss_ref(pred, target):
    p = pred.reshape(-1)
    log_p = jnp.maximum(jnp.log(p), -100.0)
    log_1mp = jnp.maximum(jnp.log(1.0 - p), -100.0)
    return jnp.mean(-(target * log_p + (1.0 - target) * log_1mp))


if __name__ == "__main__":
    key = jax.random.PRNGKey(0)
    kp, kt = jax.random.split(key)
    B, H = 8, 32
    # pred: probabilities (output of a sigmoid), strictly inside (0, 1)
    pred = jax.nn.sigmoid(jax.random.normal(kp, (B, H), dtype=jnp.float32))
    # target: binary labels, flat (matches pred.view(-1))
    target = jax.random.bernoulli(kt, p=0.5, shape=(B * H,)).astype(jnp.float32)

    ref = bce_loss_ref(pred, target)

    # Default path (general: matches PyTorch BCELoss, soft or hard targets).
    loss = jax.block_until_ready(bce_loss(pred, target))
    assert jnp.allclose(loss, ref, rtol=1e-5, atol=1e-6), (loss, ref)

    # Hard-label fast path (single log per element) — exact for binary targets.
    loss_hard = jax.block_until_ready(bce_loss(pred, target, hard_labels=True))
    assert jnp.allclose(loss_hard, ref, rtol=1e-5, atol=1e-6), (loss_hard, ref)

    print("KERNEL_OK")
</pallas_src>

<mosaic_0001>
module attributes {stable_mosaic.version = 11 : i64} {
  func.func @_bce_kernel(%arg0: memref<8x128xf32, #tpu.memory_space<vmem>>, %arg1: memref<8x128xf32, #tpu.memory_space<vmem>>, %arg2: memref<1x1xf32, #tpu.memory_space<smem>>) attributes {dimension_semantics = [], scalar_prefetch = 0 : i64, scratch_operands = 0 : i64, tpu.core_type = #tpu.core_type<tc>} {
    %c0 = arith.constant 0 : index
    %c0_0 = arith.constant 0 : index
    %0 = vector.load %arg0[%c0, %c0_0] : memref<8x128xf32, #tpu.memory_space<vmem>>, vector<8x128xf32>
    %c0_1 = arith.constant 0 : index
    %c0_2 = arith.constant 0 : index
    %1 = vector.load %arg1[%c0_1, %c0_2] : memref<8x128xf32, #tpu.memory_space<vmem>>, vector<8x128xf32>
    %2 = math.log %0 : vector<8x128xf32>
    %cst = arith.constant -1.000000e+02 : f32
    %3 = vector.broadcast %cst : f32 to vector<8x128xf32>
    %4 = arith.maximumf %2, %3 : vector<8x128xf32>
    %cst_3 = arith.constant 1.000000e+00 : f32
    %5 = vector.broadcast %cst_3 : f32 to vector<8x128xf32>
    %6 = arith.subf %5, %0 : vector<8x128xf32>
    %7 = math.log %6 : vector<8x128xf32>
    %cst_4 = arith.constant -1.000000e+02 : f32
    %8 = vector.broadcast %cst_4 : f32 to vector<8x128xf32>
    %9 = arith.maximumf %7, %8 : vector<8x128xf32>
    %10 = arith.mulf %1, %4 : vector<8x128xf32>
    %cst_5 = arith.constant 1.000000e+00 : f32
    %11 = vector.broadcast %cst_5 : f32 to vector<8x128xf32>
    %12 = arith.subf %11, %1 : vector<8x128xf32>
    %13 = arith.mulf %12, %9 : vector<8x128xf32>
    %14 = arith.addf %10, %13 : vector<8x128xf32>
    %cst_6 = arith.constant 0.000000e+00 : f32
    %15 = vector.broadcast %cst_6 : f32 to vector<8x128xf32>
    %16 = arith.subf %15, %14 : vector<8x128xf32>
    %17 = vector.shape_cast %16 : vector<8x128xf32> to vector<1x8x128xf32>
    %cst_7 = arith.constant dense<0.000000e+00> : vector<1xf32>
    %18 = vector.multi_reduction <add>, %17, %cst_7 [1, 2] : vector<1x8x128xf32> to vector<1xf32>
    %19 = vector.shape_cast %18 : vector<1xf32> to vector<1x1x1xf32>
    %20 = vector.extract %19[0, 0, 0] : f32 from vector<1x1x1xf32>
    %cst_8 = arith.constant 3.906250e-03 : f32
    %21 = arith.mulf %20, %cst_8 : f32
    %c0_9 = arith.constant 0 : index
    %c0_10 = arith.constant 0 : index
    %22 = memref.load %arg2[%c0_9, %c0_10] : memref<1x1xf32, #tpu.memory_space<smem>>
    memref.store %21, %arg2[%c0_9, %c0_10] : memref<1x1xf32, #tpu.memory_space<smem>>
    return
  }
}

</mosaic_0001>

<llo_original>
// kernel: tpu_custom_call.1
$region0: #{tpu_custom_call.1}
  #allocation0 [shape = 'u32[]', space=smem, size = 0x4, offset = 0x4, fixed_abs, tag = 'smem constant byte address 0x4 - core index']
  #allocation1 [shape = 'u32[144,128]{1,0:T(1,128)}', space=vmem, size = 0x12000, scoped, tag = 'internal scratch']
  %s0 = inlined_call_operand.hbm [shape: f32[8,128], index: 0, kind: input, shape index: {}]
  %s1 = inlined_call_operand.hbm [shape: f32[8,128], index: 1, kind: input, shape index: {}]
  %s2 = inlined_call_operand.hbm [shape: f32[1,1], index: 2, kind: output, shape index: {}]
  %s3 = sld [smem:[#allocation0]]
  $region26: #{tpu_custom_call.1} parent=0
    _
  %s5 = ssub.s32 1, %s3
  %s6 = scalar_select 0, %s5, %s3
  $region1: #{tpu_custom_call.1} parent=0
    #allocation2 [shape = 'u8[4096]{0}', space=vmem, size = 0x1000, scoped, tag = 'input window, operand 0, single buffered']
    #allocation3 [shape = 's32[1]{0}', space=sflag, size = 0x4, scoped, tag = 'scoped memory for tpu_custom_call.1']
    #allocation4 [shape = 's32[1]{0}', space=sflag, size = 0x4, scoped, tag = 'scoped memory for tpu_custom_call.1']
    #allocation5 [shape = 'u8[4096]{0}', space=vmem, size = 0x1000, scoped, tag = 'input window, operand 1, single buffered']
    #allocation6 [shape = 's32[1]{0}', space=sflag, size = 0x4, scoped, tag = 'scoped memory for tpu_custom_call.1']
    #allocation7 [shape = 'u8[512]{0}', space=smem, size = 0x200, scoped, tag = 'output window, operand 0, single buffered']
    %7 = vsyncpa [#allocation3], 0
    %8 = vsyncpa [#allocation6], 0
    %9 = vsyncpa [#allocation4], 0
    // Predicated region
    $region2: #{tpu_custom_call.1} parent=1 // pred_check
      _
    $region3: #{tpu_custom_call.1} parent=1 // pred_check_branch
      %11 = sbr.rel (0) target = $region5
    $region4: #{tpu_custom_call.1} parent=1 // pred_region
      %s13 = ssub.s32 128, 128
      %14 = vsyncadd [#allocation3], %s13
      %s16 = sshll.u32 [#allocation2], 4
      %s17 = int_to_ptr.vmem [resolvable:$true] %s16
      %19 = dma.hbm_to_vmem [thread:$0]  %s0, 128, %s17, [#allocation3]
    $region5: #{tpu_custom_call.1} parent=1 // pred_fallthru
      _
    // Predicated region
    $region6: #{tpu_custom_call.1} parent=1 // pred_check
      _
    $region7: #{tpu_custom_call.1} parent=1 // pred_check_branch
      %21 = sbr.rel (0) target = $region9
    $region8: #{tpu_custom_call.1} parent=1 // pred_region
      %s23 = ssub.s32 128, 128
      %24 = vsyncadd [#allocation6], %s23
      %s26 = sshll.u32 [#allocation5], 4
      %s27 = int_to_ptr.vmem [resolvable:$true] %s26
      %29 = dma.hbm_to_vmem [thread:$0]  %s1, 128, %s27, [#allocation6]
    $region9: #{tpu_custom_call.1} parent=1 // pred_fallthru
      _
    // Predicated region
    $region10: #{tpu_custom_call.1} parent=1 // pred_check
      _
    $region11: #{tpu_custom_call.1} parent=1 // pred_check_branch
      %31 = sbr.rel (0) target = $region13
    $region12: #{tpu_custom_call.1} parent=1 // pred_region
      %32 = dma.done [#allocation3], 128
    $region13: #{tpu_custom_call.1} parent=1 // pred_fallthru
      _
    // Predicated region
    $region14: #{tpu_custom_call.1} parent=1 // pred_check
      _
    $region15: #{tpu_custom_call.1} parent=1 // pred_check_branch
      %34 = sbr.rel (0) target = $region17
    $region16: #{tpu_custom_call.1} parent=1 // pred_region
      %35 = dma.done [#allocation6], 128
    $region17: #{tpu_custom_call.1} parent=1 // pred_fallthru
      _
    %v36 = vld [vmem:[#allocation2] sm:$0xff]
    %v37 = vld [vmem:[#allocation5] sm:$0xff]
    %v38 = vlog2.pop %v36
    %v39 = vmul.f32 %v38, 0.6931472
    %v40 = vmax.f32 %v39, -100.0
    %v41 = vsub.f32 1.0, %v36
    %v42 = vlog2.pop %v41
    %v43 = vmul.f32 %v42, 0.6931472
    %v44 = vmax.f32 %v43, -100.0
    %v45 = vmul.f32 %v37, %v40
    %v46 = vsub.f32 1.0, %v37
    %v47 = vmul.f32 %v46, %v44
    %v48 = vadd.f32 %v45, %v47
    %v49 = vsub.f32 0.0, %v48
    %50 = vadd.xlane.f32.xlu0 %v49
    %v51 = vpop.xlane.xlu0 %50
    %v52 = vrot.slane %v51, 4
    %v53 = vadd.f32 %v51, %v52
    %v54 = vrot.slane %v53, 2
    %v55 = vadd.f32 %v53, %v54
    %v56 = vrot.slane %v55, 1
    %v57 = vadd.f32 %v55, %v56
    %s58 = vtos %v57
    %s59 = smul.f32 %s58, 0.00390625
    %s60 = scalar_lea.smem [#allocation7], 0
    %61 = sst [smem:[%s60]] %s59
    // Predicated region
    $region18: #{tpu_custom_call.1} parent=1 // pred_check
      _
    $region19: #{tpu_custom_call.1} parent=1 // pred_check_branch
      %63 = sbr.rel (0) target = $region21
    $region20: #{tpu_custom_call.1} parent=1 // pred_region
      %s65 = ssub.s32 16, 16
      %66 = vsyncadd [#allocation4], %s65
      %69 = dma.smem_to_hbm [#allocation7], 16, %s2, [#allocation4]
    $region21: #{tpu_custom_call.1} parent=1 // pred_fallthru
      _
    // Predicated region
    $region22: #{tpu_custom_call.1} parent=1 // pred_check
      _
    $region23: #{tpu_custom_call.1} parent=1 // pred_check_branch
      %71 = sbr.rel (0) target = $region25
    $region24: #{tpu_custom_call.1} parent=1 // pred_region
      %72 = dma.done [#allocation4], 16
    $region25: #{tpu_custom_call.1} parent=1 // pred_fallthru
      _
    %73 = sfence
    %74 = vsyncpa [#allocation3], 1
    %75 = vsyncpa [#allocation6], 1
    %76 = vsyncpa [#allocation4], 1

</llo_original>
